<compile_context>
chip_gen: v7x
topology: tpu7x:2x2x1
jax: 0.10.0
libtpu: 0.0.40
codegen_flags: <defaults>
</compile_context>

<pallas_src>
import functools

import jax
import jax.numpy as jnp
from jax.experimental import pallas as pl
from jax.experimental.pallas import tpu as pltpu

LANES = 128                       # vreg lane dim
SUBLANES = 8                      # vreg sublane dim
TARGET_BLOCK_BYTES = 4 * 1024 * 1024   # ~4 MiB of input per pipelined block
CHUNK_ROWS = 512                  # inner fori_loop chunk (bounds VMEM temporaries)


def _round_up(x, m):
    return ((x + m - 1) // m) * m


def _num_cores_hint():
    """2 on chips with two TensorCores per device (v7x / megacore), else 1."""
    try:
        kind = jax.devices()[0].device_kind.lower()
    except Exception:
        return 2
    if "v5e" in kind or "v6" in kind or "lite" in kind:
        return 1
    return 2


def _iou_kernel(p_ref, t_ref, o_pt, o_p, o_t, *,
                tm, chunk, rows_total, tiles_per_core):
    c = pl.program_id(0)          # megacore-parallel axis
    i = pl.program_id(1)          # reduction ("arbitrary") axis

    @pl.when(i == 0)
    def _init():
        o_pt[...] = jnp.zeros_like(o_pt)
        o_p[...] = jnp.zeros_like(o_p)
        o_t[...] = jnp.zeros_like(o_t)

    # Logical (unclamped) tile position; the index_map clamps the DMA target,
    # so the replay tile (past the real tile count) re-fetches the same block
    # (no extra DMA) and is skipped here.
    block = c * tiles_per_core + i
    row0 = block * tm
    n_chunks = tm // chunk

    def accumulate(p, t):
        # Fold the (chunk, 128) slab into (8, 128) partial sums: elementwise
        # vreg adds only (VPU); no cross-lane work in the hot loop.
        o_pt[0] += jnp.sum((p * t).reshape(-1, SUBLANES, LANES), axis=0)
        o_p[0] += jnp.sum(p.reshape(-1, SUBLANES, LANES), axis=0)
        o_t[0] += jnp.sum(t.reshape(-1, SUBLANES, LANES), axis=0)

    def run(masked):
        def chunk_body(k, carry):
            r0 = k * chunk
            if n_chunks > 1:
                r0 = pl.multiple_of(r0, chunk)
            p = p_ref[pl.ds(r0, chunk), :].astype(jnp.float32)
            t = t_ref[pl.ds(r0, chunk), :].astype(jnp.float32)
            if masked:
                rid = jax.lax.broadcasted_iota(jnp.int32, (chunk, LANES), 0)
                ok = (rid + (row0 + r0)) < rows_total
                p = jnp.where(ok, p, 0.0)
                t = jnp.where(ok, t, 0.0)
            accumulate(p, t)
            return carry

        if n_chunks == 1:
            chunk_body(0, 0)
        else:
            jax.lax.fori_loop(0, n_chunks, chunk_body, 0)

    is_full = row0 + tm <= rows_total

    # Fast path (vast majority of tiles): no iota / compare / select at all.
    @pl.when(is_full)
    def _fast():
        run(masked=False)

    # Slow path: only the single partial tail tile ever takes it. Clamped
    # replay tiles (row0 >= rows_total) skip compute entirely.
    @pl.when(jnp.logical_and(jnp.logical_not(is_full), row0 < rows_total))
    def _tail():
        run(masked=True)


@functools.partial(jax.jit, static_argnames=("smooth",))
def iou_pallas(preds, targets, smooth=1.0):
    assert preds.shape == targets.shape
    # Keep inputs in their native (possibly narrow) storage dtype; the cast to
    # f32 happens per-chunk inside VMEM, so HBM traffic stays at storage width.
    p = preds.reshape(-1)
    t = targets.reshape(-1)
    n = p.shape[0]
    itemsize = jnp.dtype(p.dtype).itemsize

    # Ragged (<128 element) tail handled in the wrapper -> no jnp.pad (padding
    # would cost a full extra HBM read+write of both inputs).
    n_main = (n // LANES) * LANES
    if n_main != n:
        pt_ = p[n_main:].astype(jnp.float32)
        tt_ = t[n_main:].astype(jnp.float32)
        tail_pt = jnp.sum(pt_ * tt_)
        tail_p = jnp.sum(pt_)
        tail_t = jnp.sum(tt_)
    else:
        tail_pt = tail_p = tail_t = jnp.float32(0.0)

    if n_main == 0:
        inter, sum_p, sum_t = tail_pt, tail_p, tail_t
    else:
        rows = n_main // LANES
        p2 = p[:n_main].reshape(rows, LANES)
        t2 = t[:n_main].reshape(rows, LANES)

        # Dtype-aware tiling: up to ~4 MiB of input per block, tm a multiple of
        # the native sublane packing (f32: 8, bf16: 16, int8/bool: 32).
        sub_mult = max(SUBLANES, 32 // itemsize)
        tm_cap = TARGET_BLOCK_BYTES // (LANES * itemsize)   # 8192 rows for f32
        if rows <= 2 * CHUNK_ROWS:
            tm = _round_up(rows, sub_mult)                  # tiny: single tile
            chunk = tm
        else:
            # A handful of tiles (pipeline overlap + megacore split), capped at
            # ~4 MiB per block; tm is a multiple of CHUNK_ROWS by construction.
            tm = min(tm_cap, _round_up(pl.cdiv(rows, 4), CHUNK_ROWS))
            chunk = CHUNK_ROWS

        total_tiles = pl.cdiv(rows, tm)
        num_cores = _num_cores_hint() if total_tiles >= 2 else 1
        tiles_per_core = pl.cdiv(total_tiles, num_cores)
        max_block = total_tiles - 1

        def in_map(c, i):
            # Clamp so the DMA never walks past the array; the kernel re-derives
            # the unclamped position for masking / replay skip.
            return (jnp.minimum(c * tiles_per_core + i, max_block), 0)

        kernel = functools.partial(
            _iou_kernel, tm=tm, chunk=chunk, rows_total=rows,
            tiles_per_core=tiles_per_core)

        acc_shape = jax.ShapeDtypeStruct((num_cores, SUBLANES, LANES), jnp.float32)
        acc_spec = pl.BlockSpec((1, SUBLANES, LANES), lambda c, i: (c, 0, 0))

        o_pt, o_p, o_t = pl.pallas_call(
            kernel,
            out_shape=(acc_shape, acc_shape, acc_shape),
            grid_spec=pltpu.PrefetchScalarGridSpec(
                num_scalar_prefetch=0,
                grid=(num_cores, tiles_per_core),
                in_specs=[pl.BlockSpec((tm, LANES), in_map),
                          pl.BlockSpec((tm, LANES), in_map)],
                out_specs=(acc_spec, acc_spec, acc_spec),
            ),
            compiler_params=pltpu.CompilerParams(
                dimension_semantics=("parallel", "arbitrary"),
                vmem_limit_bytes=40 * 1024 * 1024,   # fits v5e/v6e/v7x scopes
            ),
        )(p2, t2)

        # One-time cross-lane reductions on tiny (num_cores, 8, 128) partials.
        inter = jnp.sum(o_pt) + tail_pt
        sum_p = jnp.sum(o_p) + tail_p
        sum_t = jnp.sum(o_t) + tail_t

    union = sum_p + sum_t - inter
    s = jnp.float32(smooth)
    return (inter + s) / (union + s)


def iou_ref(preds, targets, smooth=1.0):
    preds = preds.astype(jnp.float32)
    targets = targets.astype(jnp.float32)
    inter = jnp.sum(preds * targets)
    union = jnp.sum(preds) + jnp.sum(targets) - inter
    return (inter + smooth) / (union + smooth)


if __name__ == "__main__":
    key = jax.random.PRNGKey(0)
    k1, k2, k3, k4 = jax.random.split(key, 4)

    # Masks, NCHW-style shape: (batch=2, channels=4, H=16, W=16)
    preds = jax.random.uniform(k1, (2, 4, 16, 16), dtype=jnp.float32)
    targets = (jax.random.uniform(k2, (2, 4, 16, 16)) > 0.5).astype(jnp.float32)

    out = iou_pallas(preds, targets, smooth=1.0)
    jax.block_until_ready(out)
    ref = iou_ref(preds, targets, smooth=1.0)
    assert jnp.allclose(out, ref, rtol=1e-5, atol=1e-6), (out, ref)

    # Ragged shape exercising the masked partial tile + wrapper tail path.
    preds2 = jax.random.uniform(k3, (3, 5, 7, 9), dtype=jnp.float32)
    targets2 = (jax.random.uniform(k4, (3, 5, 7, 9)) > 0.5).astype(jnp.float32)
    out2 = iou_pallas(preds2, targets2, smooth=1.0)
    jax.block_until_ready(out2)
    ref2 = iou_ref(preds2, targets2, smooth=1.0)
    assert jnp.allclose(out2, ref2, rtol=1e-5, atol=1e-6), (out2, ref2)

    print("KERNEL_OK")
</pallas_src>

<mosaic_0001>
module attributes {stable_mosaic.version = 11 : i64} {
  func.func @_iou_kernel(%arg0: i32, %arg1: i32, %arg2: memref<16x128xf32, #tpu.memory_space<vmem>>, %arg3: memref<16x128xf32, #tpu.memory_space<vmem>>, %arg4: memref<1x8x128xf32, #tpu.memory_space<vmem>>, %arg5: memref<1x8x128xf32, #tpu.memory_space<vmem>>, %arg6: memref<1x8x128xf32, #tpu.memory_space<vmem>>) attributes {dimension_semantics = [#tpu.dimension_semantics<parallel>, #tpu.dimension_semantics<arbitrary>], iteration_bounds = array<i64: 1, 1>, scalar_prefetch = 0 : i64, scratch_operands = 0 : i64, tpu.core_type = #tpu.core_type<tc>, window_params = [{transform_indices = @transform_0, window_bounds = array<i64: 16, 128>}, {transform_indices = @transform_1, window_bounds = array<i64: 16, 128>}, {transform_indices = @transform_2, window_bounds = array<i64: 1, 8, 128>}, {transform_indices = @transform_3, window_bounds = array<i64: 1, 8, 128>}, {transform_indices = @transform_4, window_bounds = array<i64: 1, 8, 128>}]} {
    %c0_i32 = arith.constant 0 : i32
    %0 = arith.cmpi eq, %arg1, %c0_i32 : i32
    %1 = arith.extui %0 : i1 to i32
    %c0_i32_0 = arith.constant 0 : i32
    %2 = arith.cmpi ne, %1, %c0_i32_0 : i32
    scf.if %2 {
      %cst = arith.constant 0.000000e+00 : f32
      %15 = vector.broadcast %cst : f32 to vector<1x8x128xf32>
      %c0 = arith.constant 0 : index
      %c0_6 = arith.constant 0 : index
      %c0_7 = arith.constant 0 : index
      %16 = vector.load %arg4[%c0, %c0_6, %c0_7] : memref<1x8x128xf32, #tpu.memory_space<vmem>>, vector<1x8x128xf32>
      tpu.vector_store %arg4[%c0, %c0_6, %c0_7], %15 {strides = array<i32>} : memref<1x8x128xf32, #tpu.memory_space<vmem>>, vector<1x8x128xf32>,
      %cst_8 = arith.constant 0.000000e+00 : f32
      %17 = vector.broadcast %cst_8 : f32 to vector<1x8x128xf32>
      %c0_9 = arith.constant 0 : index
      %c0_10 = arith.constant 0 : index
      %c0_11 = arith.constant 0 : index
      %18 = vector.load %arg5[%c0_9, %c0_10, %c0_11] : memref<1x8x128xf32, #tpu.memory_space<vmem>>, vector<1x8x128xf32>
      tpu.vector_store %arg5[%c0_9, %c0_10, %c0_11], %17 {strides = array<i32>} : memref<1x8x128xf32, #tpu.memory_space<vmem>>, vector<1x8x128xf32>,
      %cst_12 = arith.constant 0.000000e+00 : f32
      %19 = vector.broadcast %cst_12 : f32 to vector<1x8x128xf32>
      %c0_13 = arith.constant 0 : index
      %c0_14 = arith.constant 0 : index
      %c0_15 = arith.constant 0 : index
      %20 = vector.load %arg6[%c0_13, %c0_14, %c0_15] : memref<1x8x128xf32, #tpu.memory_space<vmem>>, vector<1x8x128xf32>
      tpu.vector_store %arg6[%c0_13, %c0_14, %c0_15], %19 {strides = array<i32>} : memref<1x8x128xf32, #tpu.memory_space<vmem>>, vector<1x8x128xf32>,
    } else {
    }
    %c1_i32 = arith.constant 1 : i32
    %3 = arith.muli %arg0, %c1_i32 : i32
    %4 = arith.addi %3, %arg1 : i32
    %c16_i32 = arith.constant 16 : i32
    %5 = arith.muli %4, %c16_i32 : i32
    %c16_i32_1 = arith.constant 16 : i32
    %6 = arith.addi %5, %c16_i32_1 : i32
    %c16_i32_2 = arith.constant 16 : i32
    %7 = arith.cmpi sle, %6, %c16_i32_2 : i32
    %8 = arith.extui %7 : i1 to i32
    %c0_i32_3 = arith.constant 0 : i32
    %9 = arith.cmpi ne, %8, %c0_i32_3 : i32
    scf.if %9 {
      %c0 = arith.constant 0 : index
      %c0_6 = arith.constant 0 : index
      %15 = vector.load %arg2[%c0, %c0_6] : memref<16x128xf32, #tpu.memory_space<vmem>>, vector<16x128xf32>
      %c0_7 = arith.constant 0 : index
      %c0_8 = arith.constant 0 : index
      %16 = vector.load %arg3[%c0_7, %c0_8] : memref<16x128xf32, #tpu.memory_space<vmem>>, vector<16x128xf32>
      %c0_9 = arith.constant 0 : index
      %c0_10 = arith.constant 0 : index
      %c0_11 = arith.constant 0 : index
      %17 = vector.load %arg4[%c0_9, %c0_10, %c0_11] : memref<1x8x128xf32, #tpu.memory_space<vmem>>, vector<1x8x128xf32>
      %18 = vector.shape_cast %17 : vector<1x8x128xf32> to vector<8x128xf32>
      %19 = arith.mulf %15, %16 : vector<16x128xf32>
      %20 = vector.shape_cast %19 : vector<16x128xf32> to vector<2x8x128xf32>
      %cst = arith.constant dense<0.000000e+00> : vector<8x128xf32>
      %21 = vector.multi_reduction <add>, %20, %cst [0] : vector<2x8x128xf32> to vector<8x128xf32>
      %22 = arith.addf %18, %21 : vector<8x128xf32>
      %c0_12 = arith.constant 0 : index
      %c0_13 = arith.constant 0 : index
      %c0_14 = arith.constant 0 : index
      %23 = vector.load %arg4[%c0_12, %c0_13, %c0_14] : memref<1x8x128xf32, #tpu.memory_space<vmem>>, vector<1x8x128xf32>
      %24 = vector.shape_cast %23 : vector<1x8x128xf32> to vector<8x128xf32>
      %25 = vector.shape_cast %22 : vector<8x128xf32> to vector<1x8x128xf32>
      tpu.vector_store %arg4[%c0_12, %c0_13, %c0_14], %25 {strides = array<i32>} : memref<1x8x128xf32, #tpu.memory_space<vmem>>, vector<1x8x128xf32>,
      %c0_15 = arith.constant 0 : index
      %c0_16 = arith.constant 0 : index
      %c0_17 = arith.constant 0 : index
      %26 = vector.load %arg5[%c0_15, %c0_16, %c0_17] : memref<1x8x128xf32, #tpu.memory_space<vmem>>, vector<1x8x128xf32>
      %27 = vector.shape_cast %26 : vector<1x8x128xf32> to vector<8x128xf32>
      %28 = vector.shape_cast %15 : vector<16x128xf32> to vector<2x8x128xf32>
      %cst_18 = arith.constant dense<0.000000e+00> : vector<8x128xf32>
      %29 = vector.multi_reduction <add>, %28, %cst_18 [0] : vector<2x8x128xf32> to vector<8x128xf32>
      %30 = arith.addf %27, %29 : vector<8x128xf32>
      %c0_19 = arith.constant 0 : index
      %c0_20 = arith.constant 0 : index
      %c0_21 = arith.constant 0 : index
      %31 = vector.load %arg5[%c0_19, %c0_20, %c0_21] : memref<1x8x128xf32, #tpu.memory_space<vmem>>, vector<1x8x128xf32>
      %32 = vector.shape_cast %31 : vector<1x8x128xf32> to vector<8x128xf32>
      %33 = vector.shape_cast %30 : vector<8x128xf32> to vector<1x8x128xf32>
      tpu.vector_store %arg5[%c0_19, %c0_20, %c0_21], %33 {strides = array<i32>} : memref<1x8x128xf32, #tpu.memory_space<vmem>>, vector<1x8x128xf32>,
      %c0_22 = arith.constant 0 : index
      %c0_23 = arith.constant 0 : index
      %c0_24 = arith.constant 0 : index
      %34 = vector.load %arg6[%c0_22, %c0_23, %c0_24] : memref<1x8x128xf32, #tpu.memory_space<vmem>>, vector<1x8x128xf32>
      %35 = vector.shape_cast %34 : vector<1x8x128xf32> to vector<8x128xf32>
      %36 = vector.shape_cast %16 : vector<16x128xf32> to vector<2x8x128xf32>
      %cst_25 = arith.constant dense<0.000000e+00> : vector<8x128xf32>
      %37 = vector.multi_reduction <add>, %36, %cst_25 [0] : vector<2x8x128xf32> to vector<8x128xf32>
      %38 = arith.addf %35, %37 : vector<8x128xf32>
      %c0_26 = arith.constant 0 : index
      %c0_27 = arith.constant 0 : index
      %c0_28 = arith.constant 0 : index
      %39 = vector.load %arg6[%c0_26, %c0_27, %c0_28] : memref<1x8x128xf32, #tpu.memory_space<vmem>>, vector<1x8x128xf32>
      %40 = vector.shape_cast %39 : vector<1x8x128xf32> to vector<8x128xf32>
      %41 = vector.shape_cast %38 : vector<8x128xf32> to vector<1x8x128xf32>
      tpu.vector_store %arg6[%c0_26, %c0_27, %c0_28], %41 {strides = array<i32>} : memref<1x8x128xf32, #tpu.memory_space<vmem>>, vector<1x8x128xf32>,
    } else {
    }
    %true = arith.constant true
    %10 = arith.xori %7, %true : i1
    %c16_i32_4 = arith.constant 16 : i32
    %11 = arith.cmpi slt, %5, %c16_i32_4 : i32
    %12 = arith.andi %10, %11 : i1
    %13 = arith.extui %12 : i1 to i32
    %c0_i32_5 = arith.constant 0 : i32
    %14 = arith.cmpi ne, %13, %c0_i32_5 : i32
    scf.if %14 {
      %c0 = arith.constant 0 : index
      %c0_6 = arith.constant 0 : index
      %15 = vector.load %arg2[%c0, %c0_6] : memref<16x128xf32, #tpu.memory_space<vmem>>, vector<16x128xf32>
      %c0_7 = arith.constant 0 : index
      %c0_8 = arith.constant 0 : index
      %16 = vector.load %arg3[%c0_7, %c0_8] : memref<16x128xf32, #tpu.memory_space<vmem>>, vector<16x128xf32>
      %17 = tpu.iota {dimensions = array<i32: 0>} : vector<16x128xi32>
      %c0_i32_9 = arith.constant 0 : i32
      %18 = arith.addi %5, %c0_i32_9 : i32
      %19 = vector.broadcast %18 : i32 to vector<16x128xi32>
      %20 = arith.addi %17, %19 : vector<16x128xi32>
      %c16_i32_10 = arith.constant 16 : i32
      %21 = vector.broadcast %c16_i32_10 : i32 to vector<16x128xi32>
      %22 = arith.cmpi slt, %20, %21 : vector<16x128xi32>
      %cst = arith.constant 0.000000e+00 : f32
      %23 = vector.broadcast %cst : f32 to vector<16x128xf32>
      %24 = arith.select %22, %15, %23 : vector<16x128xi1>, vector<16x128xf32>
      %cst_11 = arith.constant 0.000000e+00 : f32
      %25 = vector.broadcast %cst_11 : f32 to vector<16x128xf32>
      %26 = arith.select %22, %16, %25 : vector<16x128xi1>, vector<16x128xf32>
      %c0_12 = arith.constant 0 : index
      %c0_13 = arith.constant 0 : index
      %c0_14 = arith.constant 0 : index
      %27 = vector.load %arg4[%c0_12, %c0_13, %c0_14] : memref<1x8x128xf32, #tpu.memory_space<vmem>>, vector<1x8x128xf32>
      %28 = vector.shape_cast %27 : vector<1x8x128xf32> to vector<8x128xf32>
      %29 = arith.mulf %24, %26 : vector<16x128xf32>
      %30 = vector.shape_cast %29 : vector<16x128xf32> to vector<2x8x128xf32>
      %cst_15 = arith.constant dense<0.000000e+00> : vector<8x128xf32>
      %31 = vector.multi_reduction <add>, %30, %cst_15 [0] : vector<2x8x128xf32> to vector<8x128xf32>
      %32 = arith.addf %28, %31 : vector<8x128xf32>
      %c0_16 = arith.constant 0 : index
      %c0_17 = arith.constant 0 : index
      %c0_18 = arith.constant 0 : index
      %33 = vector.load %arg4[%c0_16, %c0_17, %c0_18] : memref<1x8x128xf32, #tpu.memory_space<vmem>>, vector<1x8x128xf32>
      %34 = vector.shape_cast %33 : vector<1x8x128xf32> to vector<8x128xf32>
      %35 = vector.shape_cast %32 : vector<8x128xf32> to vector<1x8x128xf32>
      tpu.vector_store %arg4[%c0_16, %c0_17, %c0_18], %35 {strides = array<i32>} : memref<1x8x128xf32, #tpu.memory_space<vmem>>, vector<1x8x128xf32>,
      %c0_19 = arith.constant 0 : index
      %c0_20 = arith.constant 0 : index
      %c0_21 = arith.constant 0 : index
      %36 = vector.load %arg5[%c0_19, %c0_20, %c0_21] : memref<1x8x128xf32, #tpu.memory_space<vmem>>, vector<1x8x128xf32>
      %37 = vector.shape_cast %36 : vector<1x8x128xf32> to vector<8x128xf32>
      %38 = vector.shape_cast %24 : vector<16x128xf32> to vector<2x8x128xf32>
      %cst_22 = arith.constant dense<0.000000e+00> : vector<8x128xf32>
      %39 = vector.multi_reduction <add>, %38, %cst_22 [0] : vector<2x8x128xf32> to vector<8x128xf32>
      %40 = arith.addf %37, %39 : vector<8x128xf32>
      %c0_23 = arith.constant 0 : index
      %c0_24 = arith.constant 0 : index
      %c0_25 = arith.constant 0 : index
      %41 = vector.load %arg5[%c0_23, %c0_24, %c0_25] : memref<1x8x128xf32, #tpu.memory_space<vmem>>, vector<1x8x128xf32>
      %42 = vector.shape_cast %41 : vector<1x8x128xf32> to vector<8x128xf32>
      %43 = vector.shape_cast %40 : vector<8x128xf32> to vector<1x8x128xf32>
      tpu.vector_store %arg5[%c0_23, %c0_24, %c0_25], %43 {strides = array<i32>} : memref<1x8x128xf32, #tpu.memory_space<vmem>>, vector<1x8x128xf32>,
      %c0_26 = arith.constant 0 : index
      %c0_27 = arith.constant 0 : index
      %c0_28 = arith.constant 0 : index
      %44 = vector.load %arg6[%c0_26, %c0_27, %c0_28] : memref<1x8x128xf32, #tpu.memory_space<vmem>>, vector<1x8x128xf32>
      %45 = vector.shape_cast %44 : vector<1x8x128xf32> to vector<8x128xf32>
      %46 = vector.shape_cast %26 : vector<16x128xf32> to vector<2x8x128xf32>
      %cst_29 = arith.constant dense<0.000000e+00> : vector<8x128xf32>
      %47 = vector.multi_reduction <add>, %46, %cst_29 [0] : vector<2x8x128xf32> to vector<8x128xf32>
      %48 = arith.addf %45, %47 : vector<8x128xf32>
      %c0_30 = arith.constant 0 : index
      %c0_31 = arith.constant 0 : index
      %c0_32 = arith.constant 0 : index
      %49 = vector.load %arg6[%c0_30, %c0_31, %c0_32] : memref<1x8x128xf32, #tpu.memory_space<vmem>>, vector<1x8x128xf32>
      %50 = vector.shape_cast %49 : vector<1x8x128xf32> to vector<8x128xf32>
      %51 = vector.shape_cast %48 : vector<8x128xf32> to vector<1x8x128xf32>
      tpu.vector_store %arg6[%c0_30, %c0_31, %c0_32], %51 {strides = array<i32>} : memref<1x8x128xf32, #tpu.memory_space<vmem>>, vector<1x8x128xf32>,
    } else {
    }
    return
  }
  func.func @transform_0(%arg0: i32, %arg1: i32) -> (i32, i32) {
    %c1_i32 = arith.constant 1 : i32
    %0 = arith.muli %arg0, %c1_i32 : i32
    %1 = arith.addi %0, %arg1 : i32
    %c0_i32 = arith.constant 0 : i32
    %2 = arith.minsi %1, %c0_i32 : i32
    %c0_i32_0 = arith.constant 0 : i32
    %c0_i32_1 = arith.constant 0 : i32
    return %2, %c0_i32_0 : i32, i32
  }
  func.func @transform_1(%arg0: i32, %arg1: i32) -> (i32, i32) {
    %c1_i32 = arith.constant 1 : i32
    %0 = arith.muli %arg0, %c1_i32 : i32
    %1 = arith.addi %0, %arg1 : i32
    %c0_i32 = arith.constant 0 : i32
    %2 = arith.minsi %1, %c0_i32 : i32
    %c0_i32_0 = arith.constant 0 : i32
    %c0_i32_1 = arith.constant 0 : i32
    return %2, %c0_i32_0 : i32, i32
  }
  func.func @transform_2(%arg0: i32, %arg1: i32) -> (i32, i32, i32) {
    %c0_i32 = arith.constant 0 : i32
    %c0_i32_0 = arith.constant 0 : i32
    %c0_i32_1 = arith.constant 0 : i32
    return %arg0, %c0_i32, %c0_i32_0 : i32, i32, i32
  }
  func.func @transform_3(%arg0: i32, %arg1: i32) -> (i32, i32, i32) {
    %c0_i32 = arith.constant 0 : i32
    %c0_i32_0 = arith.constant 0 : i32
    %c0_i32_1 = arith.constant 0 : i32
    return %arg0, %c0_i32, %c0_i32_0 : i32, i32, i32
  }
  func.func @transform_4(%arg0: i32, %arg1: i32) -> (i32, i32, i32) {
    %c0_i32 = arith.constant 0 : i32
    %c0_i32_0 = arith.constant 0 : i32
    %c0_i32_1 = arith.constant 0 : i32
    return %arg0, %c0_i32, %c0_i32_0 : i32, i32, i32
  }
}

</mosaic_0001>

<llo_original>
// kernel: iou_pallas.1
$region0: #{iou_pallas.1}
  #allocation0 [shape = 'u32[]', space=smem, size = 0x4, offset = 0x4, fixed_abs, tag = 'smem constant byte address 0x4 - core index']
  #allocation1 [shape = 'u32[144,128]{1,0:T(1,128)}', space=vmem, size = 0x12000, scoped, tag = 'internal scratch']
  %s0 = inlined_call_operand.vmem [shape: f32[16,128], index: 0, kind: input, shape index: {}]
  %s1 = inlined_call_operand.vmem [shape: f32[16,128], index: 1, kind: input, shape index: {}]
  %s2 = inlined_call_operand.vmem [shape: f32[1,8,128], index: 2, kind: output, shape index: {0}]
  %s3 = inlined_call_operand.vmem [shape: f32[1,8,128], index: 3, kind: output, shape index: {1}]
  %s4 = inlined_call_operand.vmem [shape: f32[1,8,128], index: 4, kind: output, shape index: {2}]
  %5 = xla_tuple %s2, %s3, %s4
  %s6 = sld [smem:[#allocation0]]
  $region46: #{iou_pallas.1} parent=0
    _
  %s8 = ssub.s32 1, %s6
  %s9 = scalar_select 0, %s8, %s6
  // Predicated region
  $region2: #{iou_pallas.1} parent=0 // pred_check
    _
  $region3: #{iou_pallas.1} parent=0 // pred_check_branch
    %11 = sbr.rel (0) target = $region5
  $region4: #{iou_pallas.1} parent=0 // pred_region
    %s12 = sadd.s32 0, 0
    %p13 = scmp.lt.s32.totalorder %s12, 0
    %s14 = scalar_select %p13, %s12, 0
    %s15 = smul.u32 2, %s14
    %p16 = scmp.lt.s32.totalorder %s15, 1
    %s17 = scalar_select %p16, %s15, 1
    %s18 = smul.addr %s17, 8
    %s19 = scalar_lea.vmem %s0, %s18
    %s20 = sadd.s32 0, 0
    %p21 = scmp.lt.s32.totalorder %s20, 0
    %s22 = scalar_select %p21, %s20, 0
    %s23 = smul.u32 2, %s22
  $region5: #{iou_pallas.1} parent=0 // pred_fallthru
    _
  // Predicated region
  $region6: #{iou_pallas.1} parent=0 // pred_check
    _
  $region7: #{iou_pallas.1} parent=0 // pred_check_branch
    %25 = sbr.rel (0) target = $region9
  $region8: #{iou_pallas.1} parent=0 // pred_region
    %s26 = sadd.s32 0, 0
    %p27 = scmp.lt.s32.totalorder %s26, 0
    %s28 = scalar_select %p27, %s26, 0
    %s29 = smul.u32 2, %s28
    %p30 = scmp.lt.s32.totalorder %s29, 1
    %s31 = scalar_select %p30, %s29, 1
    %s32 = smul.addr %s31, 8
    %s33 = scalar_lea.vmem %s1, %s32
    %s34 = sadd.s32 0, 0
    %p35 = scmp.lt.s32.totalorder %s34, 0
    %s36 = scalar_select %p35, %s34, 0
    %s37 = smul.u32 2, %s36
  $region9: #{iou_pallas.1} parent=0 // pred_fallthru
    _
  %s38 = sadd.s32 0, 0
  %p39 = scmp.lt.s32.totalorder %s38, 0
  %s40 = scalar_select %p39, %s38, 0
  %s41 = smul.u32 2, %s40
  %p42 = scmp.lt.s32.totalorder %s41, 1
  %s43 = scalar_select %p42, %s41, 1
  %s44 = smul.addr %s43, 8
  %s45 = scalar_lea.vmem %s0, %s44
  %s46 = sadd.s32 0, 0
  %p47 = scmp.lt.s32.totalorder %s46, 0
  %s48 = scalar_select %p47, %s46, 0
  %s49 = smul.u32 2, %s48
  %p50 = scmp.lt.s32.totalorder %s49, 1
  %s51 = scalar_select %p50, %s49, 1
  %s52 = smul.addr %s51, 8
  %s53 = scalar_lea.vmem %s1, %s52
  %s54 = sadd.s32 0, 0
  %p55 = scmp.lt.s32.totalorder %s54, 0
  %s56 = scalar_select %p55, %s54, 0
  %s57 = smul.u32 2, %s56
  %p58 = scmp.lt.s32.totalorder %s57, 1
  %s59 = scalar_select %p58, %s57, 1
  %s60 = smul.addr %s59, 8
  %s61 = scalar_lea.vmem %s0, %s60
  %s62 = sadd.s32 0, 0
  %p63 = scmp.lt.s32.totalorder %s62, 0
  %s64 = scalar_select %p63, %s62, 0
  %s65 = smul.u32 2, %s64
  %s66 = sadd.s32 0, 0
  %p67 = scmp.lt.s32.totalorder %s66, 0
  %s68 = scalar_select %p67, %s66, 0
  %s69 = smul.u32 2, %s68
  %p70 = scmp.lt.s32.totalorder %s69, 1
  %s71 = scalar_select %p70, %s69, 1
  %s72 = smul.addr %s71, 8
  %s73 = scalar_lea.vmem %s1, %s72
  %s74 = sadd.s32 0, 0
  %p75 = scmp.lt.s32.totalorder %s74, 0
  %s76 = scalar_select %p75, %s74, 0
  %s77 = smul.u32 2, %s76
  %p78 = scmp.eq.s32.totalorder 0, 0
  // Predicated region
  $region10: #{iou_pallas.1} parent=0 // pred_check
    %p79 = pneg %p78
  $region11: #{iou_pallas.1} parent=0 // pred_check_branch
    %81 = sbr.rel (%p79) target = $region13
  $region12: #{iou_pallas.1} parent=0 // pred_region
    %82 = vst [vmem:[%s2] sm:$0xff] 0.0
    %83 = vst [vmem:[%s3] sm:$0xff] 0.0
    %84 = vst [vmem:[%s4] sm:$0xff] 0.0
  $region13: #{iou_pallas.1} parent=0 // pred_fallthru
    _
  %s85 = sadd.s32 0, 0
  %s86 = smul.u32 %s85, 16
  %s87 = sadd.s32 %s86, 16
  %p88 = scmp.le.s32.totalorder %s87, 16
  // Predicated region
  $region14: #{iou_pallas.1} parent=0 // pred_check
    %p89 = pneg %p88
  $region15: #{iou_pallas.1} parent=0 // pred_check_branch
    %91 = sbr.rel (%p89) target = $region17
  $region16: #{iou_pallas.1} parent=0 // pred_region
    %v92 = vld [vmem:[%s61] sm:$0xff]
    %v93 = vld [vmem:[%s61 + $0x8] sm:$0xff]
    %v94 = vld [vmem:[%s73] sm:$0xff]
    %v95 = vld [vmem:[%s73 + $0x8] sm:$0xff]
    %v96 = vld [vmem:[%s2] sm:$0xff]
    %v97 = vmul.f32 %v92, %v94
    %v98 = vmul.f32 %v93, %v95
    %v99 = vadd.f32 %v97, %v98
    %v100 = vadd.f32 %v96, %v99
    %101 = vst [vmem:[%s2] sm:$0xff] %v100
    %v102 = vld [vmem:[%s3] sm:$0xff]
    %v103 = vadd.f32 %v92, %v93
    %v104 = vadd.f32 %v102, %v103
    %105 = vst [vmem:[%s3] sm:$0xff] %v104
    %v106 = vld [vmem:[%s4] sm:$0xff]
    %v107 = vadd.f32 %v94, %v95
    %v108 = vadd.f32 %v106, %v107
    %109 = vst [vmem:[%s4] sm:$0xff] %v108
  $region17: #{iou_pallas.1} parent=0 // pred_fallthru
    _
  %p110 = scmp.gt.s32.totalorder %s87, 16
  %p111 = scmp.lt.s32.totalorder %s86, 16
  %p112 = pnand %p110, %p111
  %p113 = pneg %p112
  // Predicated region
  $region18: #{iou_pallas.1} parent=0 // pred_check
    _
  $region19: #{iou_pallas.1} parent=0 // pred_check_branch
    %115 = sbr.rel (%p112) target = $region21
  $region20: #{iou_pallas.1} parent=0 // pred_region
    %v116 = vld [vmem:[%s61] sm:$0xff]
    %v117 = vld [vmem:[%s61 + $0x8] sm:$0xff]
    %v118 = vld [vmem:[%s73] sm:$0xff]
    %v119 = vld [vmem:[%s73 + $0x8] sm:$0xff]
    %v120 = vlaneseq
    %v121 = vshrl.u32 %v120, 7
    %v122 = vadd.s32 %v121, 8
    %v123 = vstv %s86
    %v124 = vadd.s32 %v121, %v123
    %v125 = vadd.s32 %v122, %v123
    %vm126 = vcmp.lt.s32.totalorder %v124, 16
    %vm127 = vcmp.lt.s32.totalorder %v125, 16
    %v128 = vsel %vm126, %v116, 0.0
    %v129 = vsel %vm127, %v117, 0.0
    %v130 = vsel %vm126, %v118, 0.0
    %v131 = vsel %vm127, %v119, 0.0
    %v132 = vld [vmem:[%s2] sm:$0xff]
    %v133 = vmul.f32 %v128, %v130
    %v134 = vmul.f32 %v129, %v131
    %v135 = vadd.f32 %v133, %v134
    %v136 = vadd.f32 %v132, %v135
    %137 = vst [vmem:[%s2] sm:$0xff] %v136
    %v138 = vld [vmem:[%s3] sm:$0xff]
    %v139 = vadd.f32 %v128, %v129
    %v140 = vadd.f32 %v138, %v139
    %141 = vst [vmem:[%s3] sm:$0xff] %v140
    %v142 = vld [vmem:[%s4] sm:$0xff]
    %v143 = vadd.f32 %v130, %v131
    %v144 = vadd.f32 %v142, %v143
    %145 = vst [vmem:[%s4] sm:$0xff] %v144
  $region21: #{iou_pallas.1} parent=0 // pred_fallthru
    _
  // Predicated region
  $region22: #{iou_pallas.1} parent=0 // pred_check
    _
  $region23: #{iou_pallas.1} parent=0 // pred_check_branch
    %147 = sbr.rel (0) target = $region25
  $region24: #{iou_pallas.1} parent=0 // pred_region
    _
  $region25: #{iou_pallas.1} parent=0 // pred_fallthru
    _
  // Predicated region
  $region26: #{iou_pallas.1} parent=0 // pred_check
    _
  $region27: #{iou_pallas.1} parent=0 // pred_check_branch
    %149 = sbr.rel (0) target = $region29
  $region28: #{iou_pallas.1} parent=0 // pred_region
    _
  $region29: #{iou_pallas.1} parent=0 // pred_fallthru
    _
  // Predicated region
  $region30: #{iou_pallas.1} parent=0 // pred_check
    _
  $region31: #{iou_pallas.1} parent=0 // pred_check_branch
    %151 = sbr.rel (0) target = $region33
  $region32: #{iou_pallas.1} parent=0 // pred_region
    _
  $region33: #{iou_pallas.1} parent=0 // pred_fallthru
    _
  // Predicated region
  $region34: #{iou_pallas.1} parent=0 // pred_check
    _
  $region35: #{iou_pallas.1} parent=0 // pred_check_branch
    %153 = sbr.rel (0) target = $region37
  $region36: #{iou_pallas.1} parent=0 // pred_region
    _
  $region37: #{iou_pallas.1} parent=0 // pred_fallthru
    _
  // Predicated region
  $region38: #{iou_pallas.1} parent=0 // pred_check
    _
  $region39: #{iou_pallas.1} parent=0 // pred_check_branch
    %155 = sbr.rel (0) target = $region41
  $region40: #{iou_pallas.1} parent=0 // pred_region
    _
  $region41: #{iou_pallas.1} parent=0 // pred_fallthru
    _
  // Predicated region
  $region42: #{iou_pallas.1} parent=0 // pred_check
    _
  $region43: #{iou_pallas.1} parent=0 // pred_check_branch
    %157 = sbr.rel (0) target = $region45
  $region44: #{iou_pallas.1} parent=0 // pred_region
    _
  $region45: #{iou_pallas.1} parent=0 // pred_fallthru
    _

</llo_original>
